<compile_context>
chip_gen: v7x
topology: tpu7x:2x2x1
jax: 0.10.0
libtpu: 0.0.40
codegen_flags: <defaults>
</compile_context>

<pallas_src>
import functools
import math

import jax
import jax.numpy as jnp
from jax.experimental import pallas as pl
from jax.experimental.pallas import tpu as pltpu


_LANES = 128     # TPU vreg lane width
_SUBLANES = 8    # TPU vreg sublane count (f32)


def _round_up(x, n):
    return ((x + n - 1) // n) * n


def _is_concrete(x):
    """True if x is a concrete jax.Array (safe to cache on the instance)."""
    try:
        return isinstance(x, jax.Array) and not isinstance(x, jax.core.Tracer)
    except Exception:
        return isinstance(x, jax.Array)


@functools.lru_cache(maxsize=1)
def _num_tensorcores():
    """Best-effort TensorCore-per-chip count; defaults to 1 (no forced split)."""
    try:
        info = pltpu.get_tpu_info()
        for attr in ("num_cores", "num_tensorcores", "tensorcore_count",
                     "cores_per_chip", "core_count"):
            v = getattr(info, attr, None)
            if isinstance(v, int) and 1 <= v <= 8:
                return v
    except Exception:
        pass
    try:
        kind = jax.devices()[0].device_kind.lower()
        if "v7" in kind:
            return 2  # v7x: 2 TensorCores share "parallel" grid axes
    except Exception:
        pass
    return 1


def _eddy_lifetime_kernel(coeff_ref, k_ref, out_ref):
    """tau = coeff * (||k||^2)^(-1/3) per point.

    coeff_ref : (1,) f32 in SMEM    coeff = time_scale * length_scale^(-2/3)
    k_ref     : (3, TR, 128)        component-planar wavevectors, caller dtype
    out_ref   : (TR, 128)           eddy lifetime per point, caller dtype
    """
    k0 = k_ref[0].astype(jnp.float32)                 # VPU cast, free
    k1 = k_ref[1].astype(jnp.float32)
    k2 = k_ref[2].astype(jnp.float32)
    ksq = k0 * k0 + k1 * k1 + k2 * k2                 # pure VPU, no XLU reduce
    # Ragged/padded tail lanes may feed garbage into log(); harmless, sliced away.
    tau = coeff_ref[0] * jnp.exp(jnp.float32(-1.0 / 3.0) * jnp.log(ksq))
    out_ref[...] = tau.astype(out_ref.dtype)


class EddyLifetimeFunction:
    """Mann power-law eddy lifetime tau(k) = T * (L * ||k||)^(-2/3), via Pallas."""

    def __init__(self, length_scale=0.59, time_scale=3.9):
        # deterministic parameter initialization (no checkpoint load);
        # scales may later be swapped for traced/trainable values — coeff is
        # computed with jnp and fed to the kernel through SMEM, so no recompile.
        self.length_scale = length_scale
        self.time_scale = time_scale
        self._cached_k = None
        self._cached_planar = None
        self._cached_rows_pad = None

    # ---- parameters ------------------------------------------------------
    def _coeff(self):
        L = jnp.asarray(self.length_scale, jnp.float32)
        T = jnp.asarray(self.time_scale, jnp.float32)
        return (T * L ** jnp.float32(-2.0 / 3.0)).reshape(1)

    # ---- layout plumbing ---------------------------------------------------
    def _planarize(self, k, m):
        """(..., 3) -> (3, rows_pad, 128) component-planar, caller dtype."""
        rows_pad = _round_up(pl.cdiv(m, _LANES), _SUBLANES)
        m_pad = rows_pad * _LANES
        kf = k.reshape(-1, 3)
        if m_pad > m:
            # tiny pad (<8 rows); ones keep log() finite in the discarded tail
            kf = jnp.pad(kf, ((0, m_pad - m), (0, 0)), constant_values=1.0)
        return kf.T.reshape(3, rows_pad, _LANES), rows_pad

    def _get_planar(self, k, m):
        if self._cached_k is not None and k is self._cached_k:
            return self._cached_planar, self._cached_rows_pad
        planar, rows_pad = self._planarize(k, m)
        if _is_concrete(k):  # fixed-grid fitting loops: pay the transpose once
            self._cached_k = k
            self._cached_planar = planar
            self._cached_rows_pad = rows_pad
        return planar, rows_pad

    # ---- forward -----------------------------------------------------------
    def __call__(self, k):
        return self.forward(k)

    def forward(self, k, max_rows_per_step=2048, fastpath_points=1024):
        k = jnp.asarray(k)
        if k.shape[-1] != 3:
            raise ValueError("k must have shape (..., 3)")
        out_shape = k.shape[:-1]
        dtype = k.dtype
        m = math.prod(out_shape) if out_shape else 1

        coeff = self._coeff()

        # Small inputs: launch/pad/transpose overhead dominates; plain jnp is
        # a single fused elementwise expression.
        if m <= fastpath_points:
            kf = k.reshape(-1, 3).astype(jnp.float32)
            ksq = jnp.sum(kf * kf, axis=-1)
            tau = coeff[0] * ksq ** jnp.float32(-1.0 / 3.0)
            return tau.reshape(out_shape).astype(dtype)

        planar, rows_pad = self._get_planar(k, m)

        # ---- tiling: TR rows of 128 lanes per grid step --------------------
        tr = min(max_rows_per_step, rows_pad)           # multiple of 8
        num_tc = _num_tensorcores()
        if num_tc > 1 and rows_pad >= 2 * _SUBLANES:
            # v7x: keep the step count a multiple of the TC count so neither
            # core idles on a mem-bound kernel.
            n_steps = pl.cdiv(rows_pad, tr)
            if n_steps % num_tc:
                n_steps = _round_up(n_steps, num_tc)
                tr = _round_up(pl.cdiv(rows_pad, n_steps), _SUBLANES)
        n_steps = pl.cdiv(rows_pad, tr)                 # last block may be ragged

        n_pts = rows_pad * _LANES
        cost = pl.CostEstimate(
            flops=7 * n_pts,
            transcendentals=2 * n_pts,
            bytes_accessed=3 * n_pts * planar.dtype.itemsize
                           + n_pts * dtype.itemsize + 4,
        )

        tau = pl.pallas_call(
            _eddy_lifetime_kernel,
            out_shape=jax.ShapeDtypeStruct((rows_pad, _LANES), dtype),
            grid=(n_steps,),
            in_specs=[
                pl.BlockSpec(memory_space=pltpu.MemorySpace.SMEM),       # coeff
                pl.BlockSpec((3, tr, _LANES), lambda i: (0, i, 0)),      # k slab
            ],
            out_specs=pl.BlockSpec((tr, _LANES), lambda i: (i, 0)),
            compiler_params=pltpu.CompilerParams(
                dimension_semantics=("parallel",),
            ),
            cost_estimate=cost,
        )(coeff, planar)                                # (rows_pad, 128), caller dtype

        return tau.reshape(-1)[:m].reshape(out_shape)


def _reference(k, length_scale, time_scale):
    knorm = jnp.linalg.norm(k.astype(jnp.float32), axis=-1)
    return (time_scale * (length_scale * knorm) ** (-2.0 / 3.0)).astype(k.dtype)


if __name__ == "__main__":
    model = EddyLifetimeFunction(length_scale=0.59, time_scale=3.9)

    # Pallas path: 2*16*128 = 4096 wavevectors, f32.
    k_big = jax.random.uniform(jax.random.PRNGKey(0), (2, 16, 128, 3),
                               dtype=jnp.float32, minval=0.1, maxval=5.0)
    tau_big = jax.block_until_ready(model(k_big))
    assert tau_big.shape == k_big.shape[:-1], (tau_big.shape, k_big.shape[:-1])
    ref_big = _reference(k_big, model.length_scale, model.time_scale)
    assert jnp.allclose(tau_big, ref_big, rtol=1e-4, atol=1e-5), \
        float(jnp.max(jnp.abs(tau_big - ref_big)))

    # Cached-planar path (same grid buffer reused, as in a fitting loop).
    tau_big2 = jax.block_until_ready(model(k_big))
    assert jnp.allclose(tau_big, tau_big2)

    # bf16 input: stays bf16 through the DMA, f32 math in-kernel, bf16 out.
    k_bf16 = jax.random.uniform(jax.random.PRNGKey(1), (4, 32, 32, 3),
                                dtype=jnp.float32, minval=0.1,
                                maxval=5.0).astype(jnp.bfloat16)
    tau_bf = jax.block_until_ready(model(k_bf16))
    assert tau_bf.dtype == jnp.bfloat16 and tau_bf.shape == k_bf16.shape[:-1]
    ref_bf = _reference(k_bf16.astype(jnp.float32), model.length_scale,
                        model.time_scale)
    assert jnp.allclose(tau_bf.astype(jnp.float32), ref_bf,
                        rtol=3e-2, atol=1e-2)

    # Small-input fast path (pure jnp), same semantics.
    k_small = jax.random.uniform(jax.random.PRNGKey(2), (2, 8, 16, 3),
                                 dtype=jnp.float32, minval=0.1, maxval=5.0)
    tau_small = jax.block_until_ready(model(k_small))
    assert tau_small.shape == k_small.shape[:-1]
    ref_small = _reference(k_small, model.length_scale, model.time_scale)
    assert jnp.allclose(tau_small, ref_small, rtol=1e-4, atol=1e-5)

    print("KERNEL_OK")
</pallas_src>

<mosaic_0001>
module attributes {stable_mosaic.version = 11 : i64} {
  func.func @_eddy_lifetime_kernel(%arg0: i32, %arg1: memref<1xf32, #tpu.memory_space<smem>>, %arg2: memref<3x32x128xf32, #tpu.memory_space<vmem>>, %arg3: memref<32x128xf32, #tpu.memory_space<vmem>>) attributes {dimension_semantics = [#tpu.dimension_semantics<parallel>], iteration_bounds = array<i64: 1>, scalar_prefetch = 0 : i64, scratch_operands = 0 : i64, tpu.core_type = #tpu.core_type<tc>, window_params = [{transform_indices = @transform_0, window_bounds = array<i64: 1>}, {transform_indices = @transform_1, window_bounds = array<i64: 3, 32, 128>}, {transform_indices = @transform_2, window_bounds = array<i64: 32, 128>}]} {
    %c0 = arith.constant 0 : index
    %c0_0 = arith.constant 0 : index
    %c0_1 = arith.constant 0 : index
    %0 = vector.load %arg2[%c0, %c0_0, %c0_1] : memref<3x32x128xf32, #tpu.memory_space<vmem>>, vector<1x32x128xf32>
    %1 = vector.shape_cast %0 : vector<1x32x128xf32> to vector<32x128xf32>
    %c1 = arith.constant 1 : index
    %c0_2 = arith.constant 0 : index
    %c0_3 = arith.constant 0 : index
    %2 = vector.load %arg2[%c1, %c0_2, %c0_3] : memref<3x32x128xf32, #tpu.memory_space<vmem>>, vector<1x32x128xf32>
    %3 = vector.shape_cast %2 : vector<1x32x128xf32> to vector<32x128xf32>
    %c2 = arith.constant 2 : index
    %c0_4 = arith.constant 0 : index
    %c0_5 = arith.constant 0 : index
    %4 = vector.load %arg2[%c2, %c0_4, %c0_5] : memref<3x32x128xf32, #tpu.memory_space<vmem>>, vector<1x32x128xf32>
    %5 = vector.shape_cast %4 : vector<1x32x128xf32> to vector<32x128xf32>
    %6 = arith.mulf %1, %1 : vector<32x128xf32>
    %7 = arith.mulf %3, %3 : vector<32x128xf32>
    %8 = arith.addf %6, %7 : vector<32x128xf32>
    %9 = arith.mulf %5, %5 : vector<32x128xf32>
    %10 = arith.addf %8, %9 : vector<32x128xf32>
    %c0_6 = arith.constant 0 : index
    %11 = memref.load %arg1[%c0_6] : memref<1xf32, #tpu.memory_space<smem>>
    %12 = math.log %10 : vector<32x128xf32>
    %cst = arith.constant -0.333333343 : f32
    %13 = vector.broadcast %cst : f32 to vector<32x128xf32>
    %14 = arith.mulf %13, %12 : vector<32x128xf32>
    %15 = math.exp %14 : vector<32x128xf32>
    %16 = vector.broadcast %11 : f32 to vector<32x128xf32>
    %17 = arith.mulf %16, %15 : vector<32x128xf32>
    %c0_7 = arith.constant 0 : index
    %c0_8 = arith.constant 0 : index
    %18 = vector.load %arg3[%c0_7, %c0_8] : memref<32x128xf32, #tpu.memory_space<vmem>>, vector<32x128xf32>
    tpu.vector_store %arg3[%c0_7, %c0_8], %17 {strides = array<i32>} : memref<32x128xf32, #tpu.memory_space<vmem>>, vector<32x128xf32>,
    return
  }
  func.func @transform_0(%arg0: i32) -> i32 {
    %c0_i32 = arith.constant 0 : i32
    %c0_i32_0 = arith.constant 0 : i32
    return %c0_i32 : i32
  }
  func.func @transform_1(%arg0: i32) -> (i32, i32, i32) {
    %c0_i32 = arith.constant 0 : i32
    %c0_i32_0 = arith.constant 0 : i32
    %c0_i32_1 = arith.constant 0 : i32
    return %c0_i32, %arg0, %c0_i32_0 : i32, i32, i32
  }
  func.func @transform_2(%arg0: i32) -> (i32, i32) {
    %c0_i32 = arith.constant 0 : i32
    %c0_i32_0 = arith.constant 0 : i32
    return %arg0, %c0_i32 : i32, i32
  }
}

</mosaic_0001>

<llo_original>
// kernel: tpu_custom_call.1
$region0: #{tpu_custom_call.1}
  #allocation0 [shape = 'u32[]', space=smem, size = 0x4, offset = 0x4, fixed_abs, tag = 'smem constant byte address 0x4 - core index']
  #allocation1 [shape = 'u32[144,128]{1,0:T(1,128)}', space=vmem, size = 0x12000, scoped, tag = 'internal scratch']
  #allocation2 [shape = 'f32[1]{0:T(128)S(6)}', space=smem, size = 0x200, scoped, tag = 'scoped memory for tpu_custom_call.1']
  %s0 = inlined_call_operand.<no memory space> [shape: f32[1], index: 0, kind: input, shape index: {}]
  %s1 = inlined_call_operand.hbm [shape: f32[3,32,128], index: 1, kind: input, shape index: {}]
  %s2 = inlined_call_operand.hbm [shape: f32[32,128], index: 2, kind: output, shape index: {}]
  %s3 = sld [smem:[#allocation0]]
  $region22: #{tpu_custom_call.1} parent=0
    _
  %s5 = ssub.s32 1, %s3
  %s6 = scalar_select 0, %s5, %s3
  %7 = sst [smem:[#allocation2]] %s0
  $region1: #{tpu_custom_call.1} parent=0
    #allocation3 [shape = 'u8[49152]{0}', space=vmem, size = 0xc000, scoped, tag = 'input window, operand 1, single buffered']
    #allocation4 [shape = 's32[1]{0}', space=sflag, size = 0x4, scoped, tag = 'scoped memory for tpu_custom_call.1']
    #allocation5 [shape = 's32[1]{0}', space=sflag, size = 0x4, scoped, tag = 'scoped memory for tpu_custom_call.1']
    #allocation6 [shape = 'u8[16384]{0}', space=vmem, size = 0x4000, scoped, tag = 'output window, operand 0, single buffered']
    %8 = vsyncpa [#allocation4], 0
    %9 = vsyncpa [#allocation5], 0
    // Predicated region
    $region2: #{tpu_custom_call.1} parent=1 // pred_check
      _
    $region3: #{tpu_custom_call.1} parent=1 // pred_check_branch
      %11 = sbr.rel (0) target = $region5
    $region4: #{tpu_custom_call.1} parent=1 // pred_region
      _
    $region5: #{tpu_custom_call.1} parent=1 // pred_fallthru
      _
    // Predicated region
    $region6: #{tpu_custom_call.1} parent=1 // pred_check
      _
    $region7: #{tpu_custom_call.1} parent=1 // pred_check_branch
      %13 = sbr.rel (0) target = $region9
    $region8: #{tpu_custom_call.1} parent=1 // pred_region
      %s15 = ssub.s32 1536, 1536
      %16 = vsyncadd [#allocation4], %s15
      %s17 = sshll.u32 [#allocation3], 4
      %s18 = int_to_ptr.vmem [resolvable:$true] %s17
      %23 = dma.hbm_to_vmem [thread:$0]  %s1, 1536, %s18, [#allocation4], 128, 128, 8
    $region9: #{tpu_custom_call.1} parent=1 // pred_fallthru
      _
    // Predicated region
    $region10: #{tpu_custom_call.1} parent=1 // pred_check
      _
    $region11: #{tpu_custom_call.1} parent=1 // pred_check_branch
      %25 = sbr.rel (0) target = $region13
    $region12: #{tpu_custom_call.1} parent=1 // pred_region
      %26 = dma.done [#allocation4], 1536
    $region13: #{tpu_custom_call.1} parent=1 // pred_fallthru
      _
    %v27 = vld [vmem:[#allocation3] sm:$0xff]
    %v28 = vld [vmem:[#allocation3 + $0x8] sm:$0xff]
    %v29 = vld [vmem:[#allocation3 + $0x10] sm:$0xff]
    %v30 = vld [vmem:[#allocation3 + $0x18] sm:$0xff]
    %s31 = scalar_lea.vmem [#allocation3], 32
    %v32 = vld [vmem:[%s31] sm:$0xff]
    %v33 = vld [vmem:[%s31 + $0x8] sm:$0xff]
    %v34 = vld [vmem:[%s31 + $0x10] sm:$0xff]
    %v35 = vld [vmem:[%s31 + $0x18] sm:$0xff]
    %s36 = scalar_lea.vmem [#allocation3], 64
    %v37 = vld [vmem:[%s36] sm:$0xff]
    %v38 = vld [vmem:[%s36 + $0x8] sm:$0xff]
    %v39 = vld [vmem:[%s36 + $0x10] sm:$0xff]
    %v40 = vld [vmem:[%s36 + $0x18] sm:$0xff]
    %v41 = vmul.f32 %v27, %v27
    %v42 = vmul.f32 %v28, %v28
    %v43 = vmul.f32 %v29, %v29
    %v44 = vmul.f32 %v30, %v30
    %v45 = vmul.f32 %v32, %v32
    %v46 = vmul.f32 %v33, %v33
    %v47 = vmul.f32 %v34, %v34
    %v48 = vmul.f32 %v35, %v35
    %v49 = vadd.f32 %v41, %v45
    %v50 = vadd.f32 %v42, %v46
    %v51 = vadd.f32 %v43, %v47
    %v52 = vadd.f32 %v44, %v48
    %v53 = vmul.f32 %v37, %v37
    %v54 = vmul.f32 %v38, %v38
    %v55 = vmul.f32 %v39, %v39
    %v56 = vmul.f32 %v40, %v40
    %v57 = vadd.f32 %v49, %v53
    %v58 = vadd.f32 %v50, %v54
    %v59 = vadd.f32 %v51, %v55
    %v60 = vadd.f32 %v52, %v56
    %s61 = sld [smem:[#allocation2]]
    %v62 = vlog2.pop %v57
    %v63 = vmul.f32 %v62, 0.6931472
    %v64 = vlog2.pop %v58
    %v65 = vmul.f32 %v64, 0.6931472
    %v66 = vlog2.pop %v59
    %v67 = vmul.f32 %v66, 0.6931472
    %v68 = vlog2.pop %v60
    %v69 = vmul.f32 %v68, 0.6931472
    %v70 = vmul.f32 %v63, -0.33333334
    %v71 = vmul.f32 %v65, -0.33333334
    %v72 = vmul.f32 %v67, -0.33333334
    %v73 = vmul.f32 %v69, -0.33333334
    %v74 = vmul.f32 %v70, 1.442695
    %v75 = vpow.pop %v74
    %v76 = vmul.f32 %v71, 1.442695
    %v77 = vpow.pop %v76
    %v78 = vmul.f32 %v72, 1.442695
    %v79 = vpow.pop %v78
    %v80 = vmul.f32 %v73, 1.442695
    %v81 = vpow.pop %v80
    %v82 = vstv %s61
    %v83 = vmul.f32 %v82, %v75
    %v84 = vmul.f32 %v82, %v77
    %v85 = vmul.f32 %v82, %v79
    %v86 = vmul.f32 %v82, %v81
    %87 = vst [vmem:[#allocation6] sm:$0xff] %v83
    %88 = vst [vmem:[#allocation6 + $0x8] sm:$0xff] %v84
    %89 = vst [vmem:[#allocation6 + $0x10] sm:$0xff] %v85
    %90 = vst [vmem:[#allocation6 + $0x18] sm:$0xff] %v86
    // Predicated region
    $region14: #{tpu_custom_call.1} parent=1 // pred_check
      _
    $region15: #{tpu_custom_call.1} parent=1 // pred_check_branch
      %92 = sbr.rel (0) target = $region17
    $region16: #{tpu_custom_call.1} parent=1 // pred_region
      %s94 = ssub.s32 512, 512
      %95 = vsyncadd [#allocation5], %s94
      %s96 = sshll.u32 [#allocation6], 4
      %s97 = int_to_ptr.vmem [resolvable:$true] %s96
      %102 = dma.vmem_to_hbm [thread:$0]  %s97, 512, %s2, [#allocation5], 128, 128, 8
    $region17: #{tpu_custom_call.1} parent=1 // pred_fallthru
      _
    // Predicated region
    $region18: #{tpu_custom_call.1} parent=1 // pred_check
      _
    $region19: #{tpu_custom_call.1} parent=1 // pred_check_branch
      %104 = sbr.rel (0) target = $region21
    $region20: #{tpu_custom_call.1} parent=1 // pred_region
      %105 = dma.done [#allocation5], 512
    $region21: #{tpu_custom_call.1} parent=1 // pred_fallthru
      _
    %106 = vsyncpa [#allocation4], 1
    %107 = vsyncpa [#allocation5], 1

</llo_original>
